<compile_context>
chip_gen: v5e
topology: v5e:2x2
jax: 0.10.0
libtpu: 0.0.40
codegen_flags: <defaults>
</compile_context>

<pallas_src>
import jax
import jax.numpy as jnp
import numpy as np
from jax.experimental import pallas as pl
from jax.experimental.pallas import tpu as pltpu


def _pixel_norm_kernel(x_ref, o_ref):
    # x_ref block: (NB, C, T_HW); reduce over the channel axis (axis=1).
    x = x_ref[...].astype(jnp.float32)
    ssq = jnp.sum(x * x, axis=1, keepdims=True)          # (NB, 1, T_HW)
    # One exact reciprocal per (b, hw) column instead of a per-element divide.
    inv = pl.reciprocal(jnp.sqrt(ssq), approx=False)     # 1 / ||x||_2
    o_ref[...] = (x * inv).astype(o_ref.dtype)


def pixel_norm(x, *, t_hw=None, nb=None):
    """PixelNorm forward: x (B, C, H, W) -> x / ||x||_2 over dim=1."""
    B, C, H, W = x.shape
    HW = H * W
    itemsize = jnp.dtype(x.dtype).itemsize

    x2 = x.reshape(B, C, HW)

    # --- lane-axis tile: multiple of 128 that divides HW (else full HW) ---
    if t_hw is None:
        if HW % 128 == 0:
            t_hw = min(HW, 2048)
            while HW % t_hw != 0:
                t_hw -= 128
        else:
            t_hw = HW                      # full extent satisfies the (8,128) rule
    n_hw = HW // t_hw

    # --- batch rows per block: target ~2 MiB per block (caps VMEM, amortizes
    #     per-step overhead; with double-buffered in+out this stays well under
    #     v5e's 16 MiB default scoped limit and v7x's 64 MiB VMEM) ---
    if nb is None:
        bytes_per_row = C * t_hw * itemsize
        target = 2 << 20
        nb = max(1, min(B, target // max(bytes_per_row, 1)))
        while B % nb != 0:                 # nb=1 always divides
            nb -= 1
    n_b = B // nb

    out = pl.pallas_call(
        _pixel_norm_kernel,
        out_shape=jax.ShapeDtypeStruct((B, C, HW), x.dtype),
        grid_spec=pltpu.PrefetchScalarGridSpec(
            num_scalar_prefetch=0,
            grid=(n_b, n_hw),
            in_specs=[
                pl.BlockSpec((nb, C, t_hw), lambda i, j: (i, 0, j)),
            ],
            out_specs=pl.BlockSpec((nb, C, t_hw), lambda i, j: (i, 0, j)),
        ),
        compiler_params=pltpu.CompilerParams(
            dimension_semantics=("parallel", "parallel"),
        ),
    )(x2)
    return out.reshape(B, C, H, W)


def _reference(x):
    """Pure-JAX reference mirroring the PyTorch forward (p=2, no eps added)."""
    norm = jnp.sqrt(jnp.sum(x * x, axis=1, keepdims=True))
    return x / norm


if __name__ == "__main__":
    B, C, H, W = 2, 4, 16, 16

    key = jax.random.PRNGKey(0)
    x = jax.random.normal(key, (B, C, H, W), dtype=jnp.float32)

    out = pixel_norm(x)
    out = jax.block_until_ready(out)

    ref = _reference(x)
    np.testing.assert_allclose(np.asarray(out), np.asarray(ref),
                               rtol=1e-4, atol=1e-5)
    print("KERNEL_OK")
</pallas_src>

<mosaic_0001>
module attributes {stable_mosaic.version = 11 : i64} {
  func.func @_pixel_norm_kernel(%arg0: i32, %arg1: i32, %arg2: memref<2x4x256xf32, #tpu.memory_space<vmem>>, %arg3: memref<2x4x256xf32, #tpu.memory_space<vmem>>) attributes {dimension_semantics = [#tpu.dimension_semantics<parallel>, #tpu.dimension_semantics<parallel>], iteration_bounds = array<i64: 1, 1>, scalar_prefetch = 0 : i64, scratch_operands = 0 : i64, tpu.core_type = #tpu.core_type<tc>, window_params = [{transform_indices = @transform_0, window_bounds = array<i64: 2, 4, 256>}, {transform_indices = @transform_1, window_bounds = array<i64: 2, 4, 256>}]} {
    %c0 = arith.constant 0 : index
    %c0_0 = arith.constant 0 : index
    %c0_1 = arith.constant 0 : index
    %0 = vector.load %arg2[%c0, %c0_0, %c0_1] : memref<2x4x256xf32, #tpu.memory_space<vmem>>, vector<2x4x256xf32>
    %1 = arith.mulf %0, %0 : vector<2x4x256xf32>
    %cst = arith.constant dense<0.000000e+00> : vector<2x256xf32>
    %2 = vector.multi_reduction <add>, %1, %cst [1] : vector<2x4x256xf32> to vector<2x256xf32>
    %3 = vector.shape_cast %2 : vector<2x256xf32> to vector<2x1x256xf32>
    %4 = math.sqrt %3 : vector<2x1x256xf32>
    %5 = tpu.reciprocal %4 : vector<2x1x256xf32> -> vector<2x1x256xf32>
    %6 = vector.broadcast %5 : vector<2x1x256xf32> to vector<2x4x256xf32>
    %7 = arith.mulf %0, %6 : vector<2x4x256xf32>
    %c0_2 = arith.constant 0 : index
    %c0_3 = arith.constant 0 : index
    %c0_4 = arith.constant 0 : index
    %8 = vector.load %arg3[%c0_2, %c0_3, %c0_4] : memref<2x4x256xf32, #tpu.memory_space<vmem>>, vector<2x4x256xf32>
    tpu.vector_store %arg3[%c0_2, %c0_3, %c0_4], %7 {strides = array<i32>} : memref<2x4x256xf32, #tpu.memory_space<vmem>>, vector<2x4x256xf32>,
    return
  }
  func.func @transform_0(%arg0: i32, %arg1: i32) -> (i32, i32, i32) {
    %c0_i32 = arith.constant 0 : i32
    %c0_i32_0 = arith.constant 0 : i32
    return %arg0, %c0_i32, %arg1 : i32, i32, i32
  }
  func.func @transform_1(%arg0: i32, %arg1: i32) -> (i32, i32, i32) {
    %c0_i32 = arith.constant 0 : i32
    %c0_i32_0 = arith.constant 0 : i32
    return %arg0, %c0_i32, %arg1 : i32, i32, i32
  }
}

</mosaic_0001>

<llo_original>
// kernel: tpu_custom_call.1
$region0: #{tpu_custom_call.1}
  #allocation0 [shape = 'u32[]', space=smem, size = 0x4, offset = 0x4, fixed_abs, tag = 'smem constant byte address 0x4 - core index']
  #allocation1 [shape = 'u32[72,128]{1,0:T(1,128)}', space=vmem, size = 0x9000, scoped, tag = 'internal scratch']
  %s0 = inlined_call_operand.hbm [shape: f32[2,4,256], index: 0, kind: input, shape index: {}]
  %s1 = inlined_call_operand.hbm [shape: f32[2,4,256], index: 1, kind: output, shape index: {}]
  %s2 = sld [smem:[#allocation0]]
  $region18: #{tpu_custom_call.1} parent=0
    _
  %s4 = ssub.s32 1, %s2
  %s5 = scalar_select 0, %s4, %s2
  $region1: #{tpu_custom_call.1} parent=0
    #allocation2 [shape = 'u8[8192]{0}', space=vmem, size = 0x2000, scoped, tag = 'input window, operand 0, single buffered']
    #allocation3 [shape = 's32[1]{0}', space=sflag, size = 0x4, scoped, tag = 'scoped memory for tpu_custom_call.1']
    #allocation4 [shape = 's32[1]{0}', space=sflag, size = 0x4, scoped, tag = 'scoped memory for tpu_custom_call.1']
    #allocation5 [shape = 'u8[8192]{0}', space=vmem, size = 0x2000, scoped, tag = 'output window, operand 0, single buffered']
    %6 = vsyncpa [#allocation3], 0
    %7 = vsyncpa [#allocation4], 0
    // Predicated region
    $region2: #{tpu_custom_call.1} parent=1 // pred_check
      _
    $region3: #{tpu_custom_call.1} parent=1 // pred_check_branch
      %9 = sbr.rel (0) target = $region5
    $region4: #{tpu_custom_call.1} parent=1 // pred_region
      %11 = vsyncadd [#allocation3], 0
      %s12 = sshll.u32 %s0, 4
      %s13 = int_to_ptr.hbm [resolvable:$true] %s12
      %s14 = sshll.u32 [#allocation2], 4
      %s15 = int_to_ptr.vmem [resolvable:$true] %s14
      %20 = dma.hbm_to_vmem [thread:$0]  %s13, 256, %s15, [#allocation3], 128, 128, 8
    $region5: #{tpu_custom_call.1} parent=1 // pred_fallthru
      _
    // Predicated region
    $region6: #{tpu_custom_call.1} parent=1 // pred_check
      _
    $region7: #{tpu_custom_call.1} parent=1 // pred_check_branch
      %22 = sbr.rel (0) target = $region9
    $region8: #{tpu_custom_call.1} parent=1 // pred_region
      %24 = dma.done [#allocation3], 256
    $region9: #{tpu_custom_call.1} parent=1 // pred_fallthru
      _
    %v25 = vld [vmem:[#allocation2] sm:$0xff]
    %v26 = vld [vmem:[#allocation2 + $0x8] sm:$0xff]
    %v27 = vmul.f32 %v25, %v25
    %v28 = vmul.f32 %v26, %v26
    %31 = vst [vmem:[#allocation1] ss:$2 sm:$0xff] %v27
    %v32 = vld.sshfl [vmem:[#allocation1] sm:$0xff pattern:$0x75316420]
    %v33 = vld.sshfl [vmem:[#allocation1 + $0x8] sm:$0xff pattern:$0x75316420]
    %s34 = scalar_lea.vmem [#allocation1], 16
    %35 = vst [vmem:[%s34] ss:$2 sm:$0xff] %v28
    %v36 = vld.sshfl [vmem:[#allocation1 + $0x10] sm:$0xff pattern:$0x75316420]
    %v37 = vld.sshfl [vmem:[#allocation1 + $0x18] sm:$0xff pattern:$0x75316420]
    %vm42 = vcmask 1043456
    %v43 = vsel %vm42, %v32, 0.0
    %v44 = vrot.slane %v43, 4
    %v45 = vadd.f32 %v43, %v44
    %v46 = vrot.slane %v45, 2
    %v47 = vadd.f32 %v45, %v46
    %v48 = vrot.slane %v47, 1
    %v49 = vadd.f32 %v47, %v48
    %v50 = vsel %vm42, %v33, 0.0
    %v51 = vrot.slane %v50, 4
    %v52 = vadd.f32 %v50, %v51
    %v53 = vrot.slane %v52, 2
    %v54 = vadd.f32 %v52, %v53
    %v55 = vrot.slane %v54, 1
    %v56 = vadd.f32 %v54, %v55
    %v57 = vsel %vm42, %v36, 0.0
    %v58 = vrot.slane %v57, 4
    %v59 = vadd.f32 %v57, %v58
    %v60 = vrot.slane %v59, 2
    %v61 = vadd.f32 %v59, %v60
    %v62 = vrot.slane %v61, 1
    %v63 = vadd.f32 %v61, %v62
    %v64 = vsel %vm42, %v37, 0.0
    %v65 = vrot.slane %v64, 4
    %v66 = vadd.f32 %v64, %v65
    %v67 = vrot.slane %v66, 2
    %v68 = vadd.f32 %v66, %v67
    %v69 = vrot.slane %v68, 1
    %v70 = vadd.f32 %v68, %v69
    %v71 = vrsqrt.pop %v49
    %v72 = vmul.f32 %v71, %v49
    %v73 = vmul.f32 %v72, %v71
    %v74 = vmul.f32 0.5, %v73
    %v75 = vsub.f32 1.5, %v74
    %v76 = vmul.f32 %v71, %v75
    %v77 = vmul.f32 %v49, %v76
    %vm78 = vcmp.eq.f32.partialorder %v49, inf
    %v79 = vsel %vm78, %v49, %v77
    %vm80 = vcmp.eq.f32.partialorder %v49, 0.0
    %v81 = vand.u32 %v49, 2147483648
    %v82 = vsel %vm80, %v81, %v79
    %v83 = vrsqrt.pop %v56
    %v84 = vmul.f32 %v83, %v56
    %v85 = vmul.f32 %v84, %v83
    %v86 = vmul.f32 0.5, %v85
    %v87 = vsub.f32 1.5, %v86
    %v88 = vmul.f32 %v83, %v87
    %v89 = vmul.f32 %v56, %v88
    %vm90 = vcmp.eq.f32.partialorder %v56, inf
    %v91 = vsel %vm90, %v56, %v89
    %vm92 = vcmp.eq.f32.partialorder %v56, 0.0
    %v93 = vand.u32 %v56, 2147483648
    %v94 = vsel %vm92, %v93, %v91
    %v95 = vrsqrt.pop %v63
    %v96 = vmul.f32 %v95, %v63
    %v97 = vmul.f32 %v96, %v95
    %v98 = vmul.f32 0.5, %v97
    %v99 = vsub.f32 1.5, %v98
    %v100 = vmul.f32 %v95, %v99
    %v101 = vmul.f32 %v63, %v100
    %vm102 = vcmp.eq.f32.partialorder %v63, inf
    %v103 = vsel %vm102, %v63, %v101
    %vm104 = vcmp.eq.f32.partialorder %v63, 0.0
    %v105 = vand.u32 %v63, 2147483648
    %v106 = vsel %vm104, %v105, %v103
    %v107 = vrsqrt.pop %v70
    %v108 = vmul.f32 %v107, %v70
    %v109 = vmul.f32 %v108, %v107
    %v110 = vmul.f32 0.5, %v109
    %v111 = vsub.f32 1.5, %v110
    %v112 = vmul.f32 %v107, %v111
    %v113 = vmul.f32 %v70, %v112
    %vm114 = vcmp.eq.f32.partialorder %v70, inf
    %v115 = vsel %vm114, %v70, %v113
    %vm116 = vcmp.eq.f32.partialorder %v70, 0.0
    %v117 = vand.u32 %v70, 2147483648
    %v118 = vsel %vm116, %v117, %v115
    %v119 = vrcp.pop %v82
    %v120 = vmul.f32 %v82, %v119
    %v121 = vsub.f32 1.0, %v120
    %v122 = vmul.f32 %v119, %v121
    %v123 = vadd.f32 %v119, %v122
    %vm124 = vweird.f32 %v82
    %vm125 = vweird.f32 %v119
    %vm126 = vmor %vm124, %vm125
    %v127 = vsel %vm126, %v119, %v123
    %v128 = vand.u32 2147483647, %v82
    %vm129 = vcmp.eq.f32.partialorder %v128, 8.507059e+37
    %v130 = vand.u32 %v82, 2147483648
    %v131 = vor.u32 1.1754944e-38, %v130
    %v132 = vsel %vm129, %v131, %v127
    %v133 = vrcp.pop %v94
    %v134 = vmul.f32 %v94, %v133
    %v135 = vsub.f32 1.0, %v134
    %v136 = vmul.f32 %v133, %v135
    %v137 = vadd.f32 %v133, %v136
    %vm138 = vweird.f32 %v94
    %vm139 = vweird.f32 %v133
    %vm140 = vmor %vm138, %vm139
    %v141 = vsel %vm140, %v133, %v137
    %v142 = vand.u32 2147483647, %v94
    %vm143 = vcmp.eq.f32.partialorder %v142, 8.507059e+37
    %v144 = vand.u32 %v94, 2147483648
    %v145 = vor.u32 1.1754944e-38, %v144
    %v146 = vsel %vm143, %v145, %v141
    %v147 = vrcp.pop %v106
    %v148 = vmul.f32 %v106, %v147
    %v149 = vsub.f32 1.0, %v148
    %v150 = vmul.f32 %v147, %v149
    %v151 = vadd.f32 %v147, %v150
    %vm152 = vweird.f32 %v106
    %vm153 = vweird.f32 %v147
    %vm154 = vmor %vm152, %vm153
    %v155 = vsel %vm154, %v147, %v151
    %v156 = vand.u32 2147483647, %v106
    %vm157 = vcmp.eq.f32.partialorder %v156, 8.507059e+37
    %v158 = vand.u32 %v106, 2147483648
    %v159 = vor.u32 1.1754944e-38, %v158
    %v160 = vsel %vm157, %v159, %v155
    %v161 = vrcp.pop %v118
    %v162 = vmul.f32 %v118, %v161
    %v163 = vsub.f32 1.0, %v162
    %v164 = vmul.f32 %v161, %v163
    %v165 = vadd.f32 %v161, %v164
    %vm166 = vweird.f32 %v118
    %vm167 = vweird.f32 %v161
    %vm168 = vmor %vm166, %vm167
    %v169 = vsel %vm168, %v161, %v165
    %v170 = vand.u32 2147483647, %v118
    %vm171 = vcmp.eq.f32.partialorder %v170, 8.507059e+37
    %v172 = vand.u32 %v118, 2147483648
    %v173 = vor.u32 1.1754944e-38, %v172
    %v174 = vsel %vm171, %v173, %v169
    %v179 = vrot.slane %v146, 4
    %v180 = vrot.slane %v174, 4
    %v181 = vsel %vm42, %v132, %v179
    %v182 = vsel %vm42, %v160, %v180
    %v185 = vmul.f32 %v25, %v181
    %v186 = vmul.f32 %v26, %v182
    %187 = vst [vmem:[#allocation5] sm:$0xff] %v185
    %188 = vst [vmem:[#allocation5 + $0x8] sm:$0xff] %v186
    // Predicated region
    $region10: #{tpu_custom_call.1} parent=1 // pred_check
      _
    $region11: #{tpu_custom_call.1} parent=1 // pred_check_branch
      %190 = sbr.rel (0) target = $region13
    $region12: #{tpu_custom_call.1} parent=1 // pred_region
      %192 = vsyncadd [#allocation4], 0
      %s193 = sshll.u32 [#allocation5], 4
      %s194 = int_to_ptr.vmem [resolvable:$true] %s193
      %s195 = sshll.u32 %s1, 4
      %s196 = int_to_ptr.hbm [resolvable:$true] %s195
      %201 = dma.vmem_to_hbm [thread:$0]  %s194, 256, %s196, [#allocation4], 128, 128, 8
    $region13: #{tpu_custom_call.1} parent=1 // pred_fallthru
      _
    // Predicated region
    $region14: #{tpu_custom_call.1} parent=1 // pred_check
      _
    $region15: #{tpu_custom_call.1} parent=1 // pred_check_branch
      %203 = sbr.rel (0) target = $region17
    $region16: #{tpu_custom_call.1} parent=1 // pred_region
      %205 = dma.done [#allocation4], 256
    $region17: #{tpu_custom_call.1} parent=1 // pred_fallthru
      _
    %206 = vsyncpa [#allocation3], 1
    %207 = vsyncpa [#allocation4], 1

</llo_original>
